<compile_context>
chip_gen: v5e
topology: v5e:2x2
jax: 0.10.0
libtpu: 0.0.40
codegen_flags: <defaults>
</compile_context>

<pallas_src>
import functools

import jax
import jax.numpy as jnp
from jax import lax
from jax.experimental import pallas as pl
from jax.experimental.pallas import tpu as pltpu

LANES = 128
SUBLANES = 8


def _cdiv(a, b):
    return (a + b - 1) // b


def _round_up(a, b):
    return _cdiv(a, b) * b


def _sublane_multiple(*dtypes):
    # Sub-32-bit dtypes pack along sublanes: one vreg holds 8 rows of 32-bit,
    # 16 rows of bf16, 32 rows of int8/fp8.  Use the largest requirement.
    itemsize = min(jnp.dtype(d).itemsize for d in dtypes)
    return max(SUBLANES, 32 // max(1, itemsize))


def _chip_defaults():
    kind = ""
    try:
        kind = jax.devices()[0].device_kind.lower()
    except Exception:
        pass
    if "v7" in kind:
        # 8192 rows * 128 lanes * 4 B = 4 MiB f32 per input per block;
        # 2 inputs x 2 pipeline buffers = 16 MiB, well under a 48 MiB scoped
        # limit (v7x physical VMEM is 64 MiB).  2 TensorCores -> 2 parts.
        return dict(max_block_rows=8192, num_parts=2, vmem_limit=48 << 20,
                    core_parallel=True)
    if "v6" in kind:
        # 16 MiB total double-buffered input — inside the 32 MiB default
        # scoped VMEM; single TensorCore, so no part split.
        return dict(max_block_rows=8192, num_parts=1, vmem_limit=None,
                    core_parallel=False)
    # v5e (16 MiB default scoped VMEM) and unknown chips: conservative.
    return dict(max_block_rows=4096, num_parts=1, vmem_limit=None,
                core_parallel=False)


def _mse_sse_kernel(x_ref, y_ref, o_ref, *, rows, block_rows,
                    blocks_per_part, needs_mask, two_axis):
    if two_axis:
        c = pl.program_id(0)          # core axis (CORE_PARALLEL on v7x)
        i = pl.program_id(1)          # block axis within this core's slice
        block_id = c * blocks_per_part + i
    else:
        i = pl.program_id(0)
        block_id = i

    @pl.when(i == 0)
    def _():
        o_ref[...] = jnp.zeros_like(o_ref)

    d = x_ref[...].astype(jnp.float32) - y_ref[...].astype(jnp.float32)
    sq = d * d

    def _accumulate(vals):
        # Reduce only across the leading (vreg-group) axis: pure VPU adds
        # that hide under the HBM DMA.  o_ref is an (8,128) f32 partial-sum
        # tile resident across the reduction ("arbitrary") grid axis.
        o_ref[...] += jnp.sum(
            vals.reshape(block_rows // SUBLANES, SUBLANES, LANES), axis=0)

    if not needs_mask:
        _accumulate(sq)
    else:
        # NOTE: int32 `start` only overflows past ~2^31 rows (~275 G
        # elements) — unrealistic for a single loss evaluation.
        start = block_id * block_rows
        is_full = start + block_rows <= rows

        @pl.when(is_full)
        def _():
            # Hot path: interior blocks accumulate with no mask work at all.
            _accumulate(sq)

        @pl.when(jnp.logical_not(is_full))
        def _():
            # Partial edge block, or the (at most one) padded/clamped grid
            # cell: rows at or beyond `rows` must contribute exactly zero.
            row_idx = lax.broadcasted_iota(jnp.int32, (block_rows, LANES), 0)
            _accumulate(jnp.where(row_idx < rows - start, sq, 0.0))


def mse_loss(x, y):
    assert x.shape == y.shape, "MSELoss expects matching shapes"
    n = x.size
    xf = x.reshape(-1)
    yf = y.reshape(-1)

    # Elements beyond the largest multiple of 128 (< 128 of them) are folded
    # in with plain JAX, so the common case (n % 128 == 0) needs no pad/copy:
    # the (rows, 128) view of a contiguous ravel is a free reshape.
    n_main = (n // LANES) * LANES
    tail_sse = jnp.float32(0.0)
    if n_main < n:
        xt = lax.slice(xf, (n_main,), (n,)).astype(jnp.float32)
        yt = lax.slice(yf, (n_main,), (n,)).astype(jnp.float32)
        dt = xt - yt
        tail_sse = jnp.sum(dt * dt)
        if n_main == 0:
            return tail_sse / jnp.float32(n)
        # TODO(synk): this prefix slice copies both inputs when n % 128 != 0;
        # an in-kernel flat/lane-masked tail path would remove that copy.
        xf = lax.slice(xf, (0,), (n_main,))
        yf = lax.slice(yf, (0,), (n_main,))

    rows = n_main // LANES
    x2d = xf.reshape(rows, LANES)
    y2d = yf.reshape(rows, LANES)

    cfg = _chip_defaults()
    sub_mult = _sublane_multiple(x.dtype, y.dtype)
    block_rows = min(cfg["max_block_rows"], _round_up(rows, sub_mult))
    num_blocks = _cdiv(rows, block_rows)

    # Only split across cores when there is more than one block to share.
    num_parts = cfg["num_parts"] if num_blocks >= 2 else 1

    if num_parts > 1:
        blocks_per_part = _cdiv(num_blocks, num_parts)
        grid = (num_parts, blocks_per_part)
        covered_rows = num_parts * blocks_per_part * block_rows
        out_rows = num_parts * SUBLANES

        def in_map(c, i):
            # Clamp so the (at most one) padded grid cell re-reads the last
            # real block; its contribution is masked to zero in the kernel.
            return (jnp.minimum(c * blocks_per_part + i, num_blocks - 1), 0)

        out_spec = pl.BlockSpec((SUBLANES, LANES), lambda c, i: (c, 0))
        two_axis = True
    else:
        blocks_per_part = num_blocks
        grid = (num_blocks,)
        covered_rows = num_blocks * block_rows
        out_rows = SUBLANES
        in_map = lambda i: (i, 0)
        out_spec = pl.BlockSpec((SUBLANES, LANES), lambda i: (0, 0))
        two_axis = False

    needs_mask = covered_rows != rows
    # Invariant: any partial or padded block must imply masking is enabled,
    # so garbage in block padding can never reach the accumulator.
    assert covered_rows >= rows and (covered_rows == rows) == (not needs_mask)

    kernel = functools.partial(
        _mse_sse_kernel,
        rows=rows,
        block_rows=block_rows,
        blocks_per_part=blocks_per_part,
        needs_mask=needs_mask,
        two_axis=two_axis,
    )

    bytes_in = n_main * (jnp.dtype(x.dtype).itemsize
                         + jnp.dtype(y.dtype).itemsize)
    cost = pl.CostEstimate(flops=3 * n_main, transcendentals=0,
                           bytes_accessed=bytes_in + out_rows * LANES * 4)

    def run(dim_semantics):
        cp_kwargs = dict(dimension_semantics=dim_semantics)
        if cfg["vmem_limit"] is not None:
            cp_kwargs["vmem_limit_bytes"] = cfg["vmem_limit"]
        out = pl.pallas_call(
            kernel,
            out_shape=jax.ShapeDtypeStruct((out_rows, LANES), jnp.float32),
            grid_spec=pltpu.PrefetchScalarGridSpec(
                num_scalar_prefetch=0,
                grid=grid,
                in_specs=[
                    pl.BlockSpec((block_rows, LANES), in_map),
                    pl.BlockSpec((block_rows, LANES), in_map),
                ],
                out_specs=out_spec,
            ),
            compiler_params=pltpu.CompilerParams(**cp_kwargs),
            cost_estimate=cost,
        )(x2d, y2d)
        return jax.block_until_ready(out)

    if two_axis and cfg["core_parallel"]:
        try:
            partials = run((pltpu.CORE_PARALLEL, pltpu.ARBITRARY))
        except Exception:
            # Fall back to plain semantics if core-parallel lowering is not
            # supported on this chip/runtime combination.
            partials = run(("parallel", "arbitrary"))
    elif two_axis:
        partials = run(("parallel", "arbitrary"))
    else:
        partials = run(("arbitrary",))

    sse = jnp.sum(partials) + tail_sse
    return sse / jnp.float32(n)


if __name__ == "__main__":
    key = jax.random.PRNGKey(0)
    k1, k2 = jax.random.split(key)
    # Shapes consistent with a typical NCHW usage of this loss module.
    x = jax.random.normal(k1, (2, 4, 16, 16), dtype=jnp.float32)
    t = jax.random.normal(k2, (2, 4, 16, 16), dtype=jnp.float32)

    loss = mse_loss(x, t)
    jax.block_until_ready(loss)

    # Sanity check against plain-JAX reference.
    ref = jnp.mean((x - t) ** 2)
    assert jnp.allclose(loss, ref, rtol=1e-6, atol=1e-6), (loss, ref)

    print("KERNEL_OK")
</pallas_src>

<mosaic_0001>
module attributes {stable_mosaic.version = 11 : i64} {
  func.func @_mse_sse_kernel(%arg0: i32, %arg1: memref<16x128xf32, #tpu.memory_space<vmem>>, %arg2: memref<16x128xf32, #tpu.memory_space<vmem>>, %arg3: memref<8x128xf32, #tpu.memory_space<vmem>>) attributes {dimension_semantics = [#tpu.dimension_semantics<arbitrary>], iteration_bounds = array<i64: 1>, scalar_prefetch = 0 : i64, scratch_operands = 0 : i64, tpu.core_type = #tpu.core_type<tc>, window_params = [{transform_indices = @transform_0, window_bounds = array<i64: 16, 128>}, {transform_indices = @transform_1, window_bounds = array<i64: 16, 128>}, {pipeline_mode = #tpu.pipeline_mode<synchronous>, transform_indices = @transform_2, window_bounds = array<i64: 8, 128>}]} {
    %c0_i32 = arith.constant 0 : i32
    %0 = arith.cmpi eq, %arg0, %c0_i32 : i32
    %1 = arith.extui %0 : i1 to i32
    %c0_i32_0 = arith.constant 0 : i32
    %2 = arith.cmpi ne, %1, %c0_i32_0 : i32
    scf.if %2 {
      %cst_8 = arith.constant 0.000000e+00 : f32
      %12 = vector.broadcast %cst_8 : f32 to vector<8x128xf32>
      %c0_9 = arith.constant 0 : index
      %c0_10 = arith.constant 0 : index
      %13 = vector.load %arg3[%c0_9, %c0_10] : memref<8x128xf32, #tpu.memory_space<vmem>>, vector<8x128xf32>
      tpu.vector_store %arg3[%c0_9, %c0_10], %12 {strides = array<i32>} : memref<8x128xf32, #tpu.memory_space<vmem>>, vector<8x128xf32>,
    } else {
    }
    %c0 = arith.constant 0 : index
    %c0_1 = arith.constant 0 : index
    %3 = vector.load %arg1[%c0, %c0_1] : memref<16x128xf32, #tpu.memory_space<vmem>>, vector<16x128xf32>
    %c0_2 = arith.constant 0 : index
    %c0_3 = arith.constant 0 : index
    %4 = vector.load %arg2[%c0_2, %c0_3] : memref<16x128xf32, #tpu.memory_space<vmem>>, vector<16x128xf32>
    %5 = arith.subf %3, %4 : vector<16x128xf32>
    %6 = arith.mulf %5, %5 : vector<16x128xf32>
    %c0_4 = arith.constant 0 : index
    %c0_5 = arith.constant 0 : index
    %7 = vector.load %arg3[%c0_4, %c0_5] : memref<8x128xf32, #tpu.memory_space<vmem>>, vector<8x128xf32>
    %8 = vector.shape_cast %6 : vector<16x128xf32> to vector<2x8x128xf32>
    %cst = arith.constant dense<0.000000e+00> : vector<8x128xf32>
    %9 = vector.multi_reduction <add>, %8, %cst [0] : vector<2x8x128xf32> to vector<8x128xf32>
    %10 = arith.addf %7, %9 : vector<8x128xf32>
    %c0_6 = arith.constant 0 : index
    %c0_7 = arith.constant 0 : index
    %11 = vector.load %arg3[%c0_6, %c0_7] : memref<8x128xf32, #tpu.memory_space<vmem>>, vector<8x128xf32>
    tpu.vector_store %arg3[%c0_6, %c0_7], %10 {strides = array<i32>} : memref<8x128xf32, #tpu.memory_space<vmem>>, vector<8x128xf32>,
    return
  }
  func.func @transform_0(%arg0: i32) -> (i32, i32) {
    %c0_i32 = arith.constant 0 : i32
    %c0_i32_0 = arith.constant 0 : i32
    return %arg0, %c0_i32 : i32, i32
  }
  func.func @transform_1(%arg0: i32) -> (i32, i32) {
    %c0_i32 = arith.constant 0 : i32
    %c0_i32_0 = arith.constant 0 : i32
    return %arg0, %c0_i32 : i32, i32
  }
  func.func @transform_2(%arg0: i32) -> (i32, i32) {
    %c0_i32 = arith.constant 0 : i32
    %c0_i32_0 = arith.constant 0 : i32
    %c0_i32_1 = arith.constant 0 : i32
    return %c0_i32, %c0_i32_0 : i32, i32
  }
}

</mosaic_0001>

<llo_original>
// kernel: tpu_custom_call.1
$region0: #{tpu_custom_call.1}
  #allocation0 [shape = 'u32[]', space=smem, size = 0x4, offset = 0x4, fixed_abs, tag = 'smem constant byte address 0x4 - core index']
  #allocation1 [shape = 'u32[72,128]{1,0:T(1,128)}', space=vmem, size = 0x9000, scoped, tag = 'internal scratch']
  %s0 = inlined_call_operand.hbm [shape: f32[16,128], index: 0, kind: input, shape index: {}]
  %s1 = inlined_call_operand.hbm [shape: f32[16,128], index: 1, kind: input, shape index: {}]
  %s2 = inlined_call_operand.hbm [shape: f32[8,128], index: 2, kind: output, shape index: {}]
  %s3 = sld [smem:[#allocation0]]
  $region30: #{tpu_custom_call.1} parent=0
    _
  %s5 = ssub.s32 1, %s3
  %s6 = scalar_select 0, %s5, %s3
  $region1: #{tpu_custom_call.1} parent=0
    #allocation2 [shape = 'u8[8192]{0}', space=vmem, size = 0x2000, scoped, tag = 'input window, operand 0, single buffered']
    #allocation3 [shape = 's32[1]{0}', space=sflag, size = 0x4, scoped, tag = 'scoped memory for tpu_custom_call.1']
    #allocation4 [shape = 's32[1]{0}', space=sflag, size = 0x4, scoped, tag = 'scoped memory for tpu_custom_call.1']
    #allocation5 [shape = 'u8[8192]{0}', space=vmem, size = 0x2000, scoped, tag = 'input window, operand 1, single buffered']
    #allocation6 [shape = 's32[1]{0}', space=sflag, size = 0x4, scoped, tag = 'scoped memory for tpu_custom_call.1']
    #allocation7 [shape = 'u8[4096]{0}', space=vmem, size = 0x1000, scoped, tag = 'output window, operand 0, single buffered']
    %7 = vsyncpa [#allocation3], 0
    %8 = vsyncpa [#allocation6], 0
    %9 = vsyncpa [#allocation4], 0
    // Predicated region
    $region2: #{tpu_custom_call.1} parent=1 // pred_check
      _
    $region3: #{tpu_custom_call.1} parent=1 // pred_check_branch
      %11 = sbr.rel (0) target = $region5
    $region4: #{tpu_custom_call.1} parent=1 // pred_region
      %13 = vsyncadd [#allocation3], 0
      %s14 = sshll.u32 %s0, 4
      %s15 = int_to_ptr.hbm [resolvable:$true] %s14
      %s16 = sshll.u32 [#allocation2], 4
      %s17 = int_to_ptr.vmem [resolvable:$true] %s16
      %22 = dma.hbm_to_vmem [thread:$0]  %s15, 256, %s17, [#allocation3], 128, 128, 8
    $region5: #{tpu_custom_call.1} parent=1 // pred_fallthru
      _
    // Predicated region
    $region6: #{tpu_custom_call.1} parent=1 // pred_check
      _
    $region7: #{tpu_custom_call.1} parent=1 // pred_check_branch
      %24 = sbr.rel (0) target = $region9
    $region8: #{tpu_custom_call.1} parent=1 // pred_region
      %26 = vsyncadd [#allocation6], 0
      %s27 = sshll.u32 %s1, 4
      %s28 = int_to_ptr.hbm [resolvable:$true] %s27
      %s29 = sshll.u32 [#allocation5], 4
      %s30 = int_to_ptr.vmem [resolvable:$true] %s29
      %35 = dma.hbm_to_vmem [thread:$0]  %s28, 256, %s30, [#allocation6], 128, 128, 8
    $region9: #{tpu_custom_call.1} parent=1 // pred_fallthru
      _
    // Predicated region
    $region10: #{tpu_custom_call.1} parent=1 // pred_check
      _
    $region11: #{tpu_custom_call.1} parent=1 // pred_check_branch
      %37 = sbr.rel (0) target = $region13
    $region12: #{tpu_custom_call.1} parent=1 // pred_region
      %39 = dma.done [#allocation3], 256
    $region13: #{tpu_custom_call.1} parent=1 // pred_fallthru
      _
    // Predicated region
    $region14: #{tpu_custom_call.1} parent=1 // pred_check
      _
    $region15: #{tpu_custom_call.1} parent=1 // pred_check_branch
      %41 = sbr.rel (0) target = $region17
    $region16: #{tpu_custom_call.1} parent=1 // pred_region
      %43 = dma.done [#allocation6], 256
    $region17: #{tpu_custom_call.1} parent=1 // pred_fallthru
      _
    %p44 = scmp.eq.s32.totalorder 0, 0
    // Predicated region
    $region18: #{tpu_custom_call.1} parent=1 // pred_check
      %p45 = pneg %p44
    $region19: #{tpu_custom_call.1} parent=1 // pred_check_branch
      %47 = sbr.rel (%p45) target = $region21
    $region20: #{tpu_custom_call.1} parent=1 // pred_region
      %48 = vst [vmem:[#allocation7] sm:$0xff] 0.0
    $region21: #{tpu_custom_call.1} parent=1 // pred_fallthru
      _
    %v49 = vld [vmem:[#allocation2] sm:$0xff]
    %v50 = vld [vmem:[#allocation2 + $0x8] sm:$0xff]
    %v51 = vld [vmem:[#allocation5] sm:$0xff]
    %v52 = vld [vmem:[#allocation5 + $0x8] sm:$0xff]
    %v53 = vsub.f32 %v49, %v51
    %v54 = vsub.f32 %v50, %v52
    %v55 = vmul.f32 %v53, %v53
    %v56 = vmul.f32 %v54, %v54
    %v57 = vld [vmem:[#allocation7] sm:$0xff]
    %v58 = vadd.f32 %v55, %v56
    %v59 = vadd.f32 %v57, %v58
    %60 = vst [vmem:[#allocation7] sm:$0xff] %v59
    // Predicated region
    $region22: #{tpu_custom_call.1} parent=1 // pred_check
      _
    $region23: #{tpu_custom_call.1} parent=1 // pred_check_branch
      %62 = sbr.rel (0) target = $region25
    $region24: #{tpu_custom_call.1} parent=1 // pred_region
      %64 = vsyncadd [#allocation4], 0
      %s66 = sshll.u32 [#allocation7], 4
      %s67 = int_to_ptr.vmem [resolvable:$true] %s66
      %s68 = sshll.u32 %s2, 4
      %s69 = int_to_ptr.hbm [resolvable:$true] %s68
      %71 = dma.vmem_to_hbm [thread:$0]  %s67, 128, %s69, [#allocation4]
    $region25: #{tpu_custom_call.1} parent=1 // pred_fallthru
      _
    // Predicated region
    $region26: #{tpu_custom_call.1} parent=1 // pred_check
      _
    $region27: #{tpu_custom_call.1} parent=1 // pred_check_branch
      %73 = sbr.rel (0) target = $region29
    $region28: #{tpu_custom_call.1} parent=1 // pred_region
      %75 = dma.done [#allocation4], 128
    $region29: #{tpu_custom_call.1} parent=1 // pred_fallthru
      _
    %76 = vsyncpa [#allocation3], 1
    %77 = vsyncpa [#allocation6], 1
    %78 = vsyncpa [#allocation4], 1

</llo_original>
